<compile_context>
chip_gen: v7x
topology: tpu7x:2x2x1
jax: 0.10.0
libtpu: 0.0.40
codegen_flags: <defaults>
</compile_context>

<pallas_src>
import functools

import jax
import jax.numpy as jnp
from jax.experimental import pallas as pl
from jax.experimental.pallas import tpu as pltpu


LANE = 128
_MULTI_TC_MIN_BYTES = 2 * 1024 * 1024   # only split across cores above ~1 MiB/core


# ----------------------------- activation fns -----------------------------
def silu(x):
    # x * sigmoid(x), with sigmoid(x) = 0.5 * (1 + tanh(x/2)): a single EUP
    # transcendental per element (exp + divide would be two EUP ops).
    return x * (0.5 * (1.0 + jnp.tanh(0.5 * x)))


def gelu_tanh(x):
    c = 0.7978845608028654  # sqrt(2/pi)
    return 0.5 * x * (1.0 + jnp.tanh(c * (x + 0.044715 * x * x * x)))


# ------------------------------- kernel -----------------------------------
def _act_kernel(x_ref, o_ref, *, act, compute_dtype):
    x = x_ref[...].astype(compute_dtype)
    o_ref[...] = act(x).astype(o_ref.dtype)


# --------------------------- chip configuration ---------------------------
@functools.lru_cache(maxsize=1)
def _chip_config():
    """(num_tensorcores, bf16_compute_ok, target_tile_bytes, vmem_limit_bytes)."""
    kind = ""
    try:
        kind = jax.devices()[0].device_kind.lower()
    except Exception:  # no device info: fall back to conservative defaults
        pass
    is_v5e = ("v5e" in kind) or ("v5 lite" in kind) or ("v5litepod" in kind)
    is_v6 = "v6" in kind
    is_v7 = "v7" in kind
    # v5e / v6e are single-TensorCore chips (grid is a serial loop there);
    # v7x (and v4/v5p megacore) expose 2 cores that "parallel" axes shard over.
    num_tc = 1 if (is_v5e or is_v6) else 2
    bf16_compute = is_v6 or is_v7            # v5e has no bf16 VPU/EUP
    if is_v5e or is_v6:                      # 128 MiB VMEM parts: bigger tiles
        target_tile, vmem_limit = 8 << 20, 64 << 20
    else:                                    # v7x: only 64 MiB per-TC VMEM
        target_tile, vmem_limit = 4 << 20, 32 << 20
    return num_tc, bf16_compute, target_tile, vmem_limit


# --------------------------- layout selection ------------------------------
def _pick_layout(total, itemsize, num_tc, target_tile_bytes):
    """Choose (lanes, rows, block_rows) for a 128-aligned element count."""
    sub = max(8, 32 // max(int(itemsize), 1))   # native sublane multiple per dtype

    lanes = None
    for cand in (2048, 1024, 512, 256, 128):
        if total % cand == 0 and total // cand >= sub:
            lanes = cand
            break
    if lanes is None:                # tiny (but 128-aligned) input: short rows
        lanes = LANE
    rows = total // lanes

    # Rows per block sized for ~target_tile_bytes (sublane-aligned).
    target_rows = max(sub, (target_tile_bytes // (lanes * itemsize)) // sub * sub)

    # Only force a multi-step grid when >1 TensorCore can actually use it and
    # the input is big enough (>~1 MiB per core) for the split to pay off.
    min_steps = 1
    if num_tc > 1 and total * itemsize >= _MULTI_TC_MIN_BYTES:
        min_steps = num_tc

    steps = max(min_steps, pl.cdiv(rows, target_rows))
    if num_tc > 1 and steps > 1 and steps % num_tc:
        steps += num_tc - steps % num_tc      # balanced shard across cores

    if steps <= 1:
        return lanes, rows, rows              # single full-array block
    block_rows = min(rows, pl.cdiv(pl.cdiv(rows, steps), sub) * sub)
    return lanes, rows, block_rows


# ------------------------------- wrapper -----------------------------------
def activation_layer(x, act=silu):
    """Applies `act` elementwise via a Pallas TPU kernel. Matches
    ActivationLayer.forward semantics (same shape, same dtype)."""
    orig_shape = x.shape
    orig_dtype = x.dtype
    n = x.size
    if n == 0:
        return x

    itemsize = jnp.dtype(orig_dtype).itemsize
    num_tc, bf16_ok, target_tile, vmem_limit = _chip_config()
    if orig_dtype == jnp.bfloat16 and bf16_ok:
        compute_dtype = jnp.bfloat16   # halves vreg pressure / EUP work (v6e/v7x)
    else:
        compute_dtype = jnp.float32    # v5e has no bf16 VPU/EUP; f32 elsewhere

    flat = x.reshape(-1)
    n_main = (n // LANE) * LANE        # 128-aligned prefix handled by the kernel
    tail = n - n_main                  # <=127 trailing elements handled in jnp

    if n_main == 0:
        # Fewer than one lane of data: a kernel launch is pure overhead.
        # TODO(synk): tiny (<128-element) inputs stay on the plain XLA path.
        return act(flat.astype(jnp.float32)).astype(orig_dtype).reshape(orig_shape)

    main = flat[:n_main] if tail else flat
    lanes, rows, block_rows = _pick_layout(n_main, itemsize, num_tc, target_tile)
    x2d = main.reshape(rows, lanes)
    grid_len = pl.cdiv(rows, block_rows)   # ragged last block (if any) is masked

    kernel = functools.partial(_act_kernel, act=act, compute_dtype=compute_dtype)
    out2d = pl.pallas_call(
        kernel,
        out_shape=jax.ShapeDtypeStruct((rows, lanes), orig_dtype),
        grid_spec=pltpu.PrefetchScalarGridSpec(
            num_scalar_prefetch=0,
            grid=(grid_len,),
            in_specs=[pl.BlockSpec((block_rows, lanes), lambda i: (i, 0))],
            out_specs=pl.BlockSpec((block_rows, lanes), lambda i: (i, 0)),
        ),
        # Identical in/out shape, dtype and block layout: run in place when the
        # caller donates x; otherwise XLA inserts a defensive copy.
        input_output_aliases={0: 0},
        compiler_params=pltpu.CompilerParams(
            dimension_semantics=("parallel",),
            vmem_limit_bytes=vmem_limit,
        ),
        cost_estimate=pl.CostEstimate(
            flops=6 * n_main,
            transcendentals=n_main,           # one tanh per element
            bytes_accessed=2 * n_main * itemsize,
        ),
    )(x2d)

    if tail:
        y_tail = act(flat[n_main:].astype(jnp.float32)).astype(orig_dtype)
        return jnp.concatenate([out2d.reshape(-1), y_tail]).reshape(orig_shape)
    return out2d.reshape(orig_shape)


# ------------------------------- main --------------------------------------
if __name__ == "__main__":
    key = jax.random.PRNGKey(0)
    # Small NCHW-style input consistent with typical conv-net usage.
    x = jax.random.normal(key, (2, 4, 16, 16), dtype=jnp.float32)

    # ActivationLayer(act=silu)
    y = jax.block_until_ready(activation_layer(x, act=silu))
    assert y.shape == x.shape and y.dtype == x.dtype
    assert jnp.max(jnp.abs(y - jax.nn.silu(x))) < 2e-5

    # Module is act-parameterized: second activation choice.
    y2 = jax.block_until_ready(activation_layer(x, act=gelu_tanh))
    assert jnp.max(jnp.abs(y2 - jax.nn.gelu(x, approximate=True))) < 1e-4

    # Ragged shape with >128 elems: kernel on 128-aligned prefix + jnp tail.
    x_rag = jax.random.normal(jax.random.PRNGKey(1), (3, 5, 7, 3), dtype=jnp.float32)
    y_rag = jax.block_until_ready(activation_layer(x_rag, act=silu))
    assert y_rag.shape == x_rag.shape
    assert jnp.max(jnp.abs(y_rag - jax.nn.silu(x_rag))) < 2e-5

    # Tiny (<128-element) shape: plain-XLA fallback path.
    x_tiny = jax.random.normal(jax.random.PRNGKey(2), (3, 5, 7), dtype=jnp.float32)
    y_tiny = jax.block_until_ready(activation_layer(x_tiny, act=silu))
    assert y_tiny.shape == x_tiny.shape
    assert jnp.max(jnp.abs(y_tiny - jax.nn.silu(x_tiny))) < 2e-5

    # bf16 path (bf16 compute on v6e/v7x, f32 compute on v5e).
    x_bf = x.astype(jnp.bfloat16)
    y_bf = jax.block_until_ready(activation_layer(x_bf, act=silu))
    assert y_bf.dtype == jnp.bfloat16
    assert jnp.max(jnp.abs(y_bf.astype(jnp.float32)
                           - jax.nn.silu(x_bf).astype(jnp.float32))) < 1e-1

    print("KERNEL_OK")
</pallas_src>

<mosaic_0001>
module attributes {stable_mosaic.version = 11 : i64} {
  func.func @_act_kernel(%arg0: i32, %arg1: memref<8x256xf32, #tpu.memory_space<vmem>>, %arg2: memref<8x256xf32, #tpu.memory_space<vmem>>) attributes {dimension_semantics = [#tpu.dimension_semantics<parallel>], iteration_bounds = array<i64: 1>, scalar_prefetch = 0 : i64, scratch_operands = 0 : i64, tpu.core_type = #tpu.core_type<tc>, window_params = [{transform_indices = @transform_0, window_bounds = array<i64: 8, 256>}, {transform_indices = @transform_1, window_bounds = array<i64: 8, 256>}]} {
    %c0 = arith.constant 0 : index
    %c0_0 = arith.constant 0 : index
    %0 = vector.load %arg1[%c0, %c0_0] : memref<8x256xf32, #tpu.memory_space<vmem>>, vector<8x256xf32>
    %cst = arith.constant 5.000000e-01 : f32
    %1 = vector.broadcast %cst : f32 to vector<8x256xf32>
    %2 = arith.mulf %1, %0 : vector<8x256xf32>
    %3 = math.tanh %2 : vector<8x256xf32>
    %cst_1 = arith.constant 1.000000e+00 : f32
    %4 = vector.broadcast %cst_1 : f32 to vector<8x256xf32>
    %5 = arith.addf %4, %3 : vector<8x256xf32>
    %cst_2 = arith.constant 5.000000e-01 : f32
    %6 = vector.broadcast %cst_2 : f32 to vector<8x256xf32>
    %7 = arith.mulf %6, %5 : vector<8x256xf32>
    %8 = arith.mulf %0, %7 : vector<8x256xf32>
    %c0_3 = arith.constant 0 : index
    %c0_4 = arith.constant 0 : index
    %9 = vector.load %arg2[%c0_3, %c0_4] : memref<8x256xf32, #tpu.memory_space<vmem>>, vector<8x256xf32>
    tpu.vector_store %arg2[%c0_3, %c0_4], %8 {strides = array<i32>} : memref<8x256xf32, #tpu.memory_space<vmem>>, vector<8x256xf32>,
    return
  }
  func.func @transform_0(%arg0: i32) -> (i32, i32) {
    %c0_i32 = arith.constant 0 : i32
    %c0_i32_0 = arith.constant 0 : i32
    return %arg0, %c0_i32 : i32, i32
  }
  func.func @transform_1(%arg0: i32) -> (i32, i32) {
    %c0_i32 = arith.constant 0 : i32
    %c0_i32_0 = arith.constant 0 : i32
    return %arg0, %c0_i32 : i32, i32
  }
}

</mosaic_0001>

<llo_original>
// kernel: tpu_custom_call.1
$region0: #{tpu_custom_call.1}
  #allocation0 [shape = 'u32[]', space=smem, size = 0x4, offset = 0x4, fixed_abs, tag = 'smem constant byte address 0x4 - core index']
  #allocation1 [shape = 'u32[144,128]{1,0:T(1,128)}', space=vmem, size = 0x12000, scoped, tag = 'internal scratch']
  %s0 = inlined_call_operand.hbm [shape: f32[8,256], index: 0, kind: input, shape index: {}, may-alias: {0,1}]
  %s1 = inlined_call_operand.hbm [shape: f32[8,256], index: 1, kind: output, shape index: {}, may-alias: {0,1}]
  %s2 = sld [smem:[#allocation0]]
  $region18: #{tpu_custom_call.1} parent=0
    _
  %s4 = ssub.s32 1, %s2
  %s5 = scalar_select 0, %s4, %s2
  $region1: #{tpu_custom_call.1} parent=0
    #allocation2 [shape = 'u8[8192]{0}', space=vmem, size = 0x2000, scoped, tag = 'input window, operand 0, single buffered']
    #allocation3 [shape = 's32[1]{0}', space=sflag, size = 0x4, scoped, tag = 'scoped memory for tpu_custom_call.1']
    #allocation4 [shape = 's32[1]{0}', space=sflag, size = 0x4, scoped, tag = 'scoped memory for tpu_custom_call.1']
    #allocation5 [shape = 'u8[8192]{0}', space=vmem, size = 0x2000, scoped, tag = 'output window, operand 0, single buffered']
    %6 = vsyncpa [#allocation3], 0
    %7 = vsyncpa [#allocation4], 0
    // Predicated region
    $region2: #{tpu_custom_call.1} parent=1 // pred_check
      _
    $region3: #{tpu_custom_call.1} parent=1 // pred_check_branch
      %9 = sbr.rel (0) target = $region5
    $region4: #{tpu_custom_call.1} parent=1 // pred_region
      %s11 = ssub.s32 256, 256
      %12 = vsyncadd [#allocation3], %s11
      %s14 = sshll.u32 [#allocation2], 4
      %s15 = int_to_ptr.vmem [resolvable:$true] %s14
      %17 = dma.hbm_to_vmem [thread:$0]  %s0, 256, %s15, [#allocation3]
    $region5: #{tpu_custom_call.1} parent=1 // pred_fallthru
      _
    // Predicated region
    $region6: #{tpu_custom_call.1} parent=1 // pred_check
      _
    $region7: #{tpu_custom_call.1} parent=1 // pred_check_branch
      %19 = sbr.rel (0) target = $region9
    $region8: #{tpu_custom_call.1} parent=1 // pred_region
      %20 = dma.done [#allocation3], 256
    $region9: #{tpu_custom_call.1} parent=1 // pred_fallthru
      _
    %v21 = vld [vmem:[#allocation2] sm:$0xff]
    %v22 = vld [vmem:[#allocation2 + $0x8] sm:$0xff]
    %v23 = vmul.f32 %v21, 0.5
    %v24 = vmul.f32 %v22, 0.5
    %v25 = vtanh.pop %v23
    %v26 = vtanh.pop %v24
    %v27 = vadd.f32 %v25, 1.0
    %v28 = vadd.f32 %v26, 1.0
    %v29 = vmul.f32 %v27, 0.5
    %v30 = vmul.f32 %v28, 0.5
    %v31 = vmul.f32 %v21, %v29
    %v32 = vmul.f32 %v22, %v30
    %33 = vst [vmem:[#allocation5] sm:$0xff] %v31
    %34 = vst [vmem:[#allocation5 + $0x8] sm:$0xff] %v32
    // Predicated region
    $region10: #{tpu_custom_call.1} parent=1 // pred_check
      _
    $region11: #{tpu_custom_call.1} parent=1 // pred_check_branch
      %36 = sbr.rel (0) target = $region13
    $region12: #{tpu_custom_call.1} parent=1 // pred_region
      %s38 = ssub.s32 256, 256
      %39 = vsyncadd [#allocation4], %s38
      %s41 = sshll.u32 [#allocation5], 4
      %s42 = int_to_ptr.vmem [resolvable:$true] %s41
      %44 = dma.vmem_to_hbm [thread:$0]  %s42, 256, %s1, [#allocation4]
    $region13: #{tpu_custom_call.1} parent=1 // pred_fallthru
      _
    // Predicated region
    $region14: #{tpu_custom_call.1} parent=1 // pred_check
      _
    $region15: #{tpu_custom_call.1} parent=1 // pred_check_branch
      %46 = sbr.rel (0) target = $region17
    $region16: #{tpu_custom_call.1} parent=1 // pred_region
      %47 = dma.done [#allocation4], 256
    $region17: #{tpu_custom_call.1} parent=1 // pred_fallthru
      _
    %48 = vsyncpa [#allocation3], 1
    %49 = vsyncpa [#allocation4], 1

</llo_original>
